<compile_context>
chip_gen: v5e
topology: v5e:2x2
jax: 0.10.0
libtpu: 0.0.40
codegen_flags: <defaults>
</compile_context>

<pallas_src>
import jax
import jax.numpy as jnp
from jax.experimental import pallas as pl
from jax.experimental.pallas import tpu as pltpu

_LANES = 128
_DEFAULT_MAX_BLOCK_ROWS = 4096   # (4096, 128) f32 = 2 MiB / input / pipeline buffer
_SMALL_B_THRESHOLD = 8192        # below this, plain XLA beats a custom-call launch


def _round_up(x, m):
    return ((x + m - 1) // m) * m


def _cdiv(a, b):
    return -(-a // b)


def _sublane_multiple(dtype):
    # f32 -> 8, bf16 -> 16, int8/fp8 -> 32 (packed vreg sublane multiples)
    itemsize = jnp.dtype(dtype).itemsize
    return 8 * max(1, 4 // max(itemsize, 1))


def _as_float(x):
    # Keep floating inputs at native width (bf16 moves at 2 B/elem); only
    # integer/bool labels are widened.
    return x if jnp.issubdtype(x.dtype, jnp.floating) else x.astype(jnp.float32)


def _masked_neg_bce(p, y):
    """sum over valid labels of (log(1-p) + y*(log p - log(1-p))); negate later."""
    log_p = jnp.maximum(jnp.log(p), -100.0)       # torch.nn.BCELoss log clamp
    log_1mp = jnp.maximum(jnp.log(1.0 - p), -100.0)
    neg_bce = log_1mp + y * (log_p - log_1mp)     # == -(BCE), sign applied by caller
    y_int = jnp.trunc(y)                          # int() truncates toward zero
    mask = jnp.logical_or(y_int == 1.0, y_int == 0.0)
    return neg_bce, mask


def _loss_jax(pred, gt, b):
    """Fused pure-XLA path (small B / reference)."""
    p = pred.astype(jnp.float32)
    y = gt.astype(jnp.float32)
    neg_bce, mask = _masked_neg_bce(p, y)
    return -jnp.sum(jnp.where(mask, neg_bce, 0.0)) / jnp.float32(b)


def _make_kernel(total_rows, block_rows, need_row_mask):
    def kernel(pred_ref, gt_ref, partial_ref):
        p = pred_ref[...].astype(jnp.float32)
        y = gt_ref[...].astype(jnp.float32)

        neg_bce, mask = _masked_neg_bce(p, y)

        if need_row_mask:
            # Last grid block is partial: Pallas edge blocks may carry garbage
            # rows whose labels could look like 0/1 -> exclude by global row id.
            row = (pl.program_id(0) * block_rows
                   + jax.lax.broadcasted_iota(jnp.int32, p.shape, 0))
            mask = jnp.logical_and(mask, row < total_rows)

        total = jnp.sum(jnp.where(mask, neg_bce, 0.0))

        # Lane-dense partial-sum tile; grid axis stays "parallel" (no carry).
        partial_ref[...] = jnp.full(partial_ref.shape, total,
                                    dtype=partial_ref.dtype)
    return kernel


def condition_loss(pred_cls, gt_cls, pred_bbox=None, gt_bbox=None, *,
                   max_block_rows=_DEFAULT_MAX_BLOCK_ROWS,
                   small_b_threshold=_SMALL_B_THRESHOLD):
    """Pallas implementation of ConditionLoss.forward.

    pred_cls: (B,) probabilities in (0, 1)
    gt_cls:   (B,) labels
    pred_bbox / gt_bbox: accepted for signature parity; unused (as in reference).
    """
    del pred_bbox, gt_bbox  # unused by the reference forward
    b = pred_cls.shape[0]

    pred = _as_float(pred_cls).reshape(-1)
    gt = _as_float(gt_cls).reshape(-1)

    # Small-B bypass: launch/pad overhead dwarfs the work; plain XLA fusion wins.
    if b <= small_b_threshold:
        return _loss_jax(pred, gt, b)

    # ---- Lane-dense (rows, 128) layout -------------------------------------
    rows = _cdiv(b, _LANES)
    padded = rows * _LANES
    if padded != b:
        # Minimal pad to the next lane multiple only (< 1 row), decoupled from
        # block size.  pred=0.5 keeps logs finite; gt=-1 fails the {0,1} mask.
        # TODO(synk): for B % 128 != 0 this still materializes one padded copy.
        pred = jnp.pad(pred, (0, padded - b), constant_values=0.5)
        gt = jnp.pad(gt, (0, padded - b), constant_values=-1.0)
    pred2 = pred.reshape(rows, _LANES)   # free layout change when no pad
    gt2 = gt.reshape(rows, _LANES)

    sub = max(_sublane_multiple(pred2.dtype), _sublane_multiple(gt2.dtype))
    # Aim for >= 2 blocks (feeds both v7x TensorCores via "parallel") while
    # capping the tile so 2 inputs x 2 buffers stay <= 8 MiB of VMEM.
    block_rows = min(max_block_rows, _round_up(_cdiv(rows, 2), sub))
    block_rows = max(block_rows, sub)
    num_blocks = _cdiv(rows, block_rows)
    need_row_mask = (rows % block_rows) != 0

    kernel = _make_kernel(rows, block_rows, need_row_mask)

    n_elems = rows * _LANES
    bytes_in = (pred2.size * pred2.dtype.itemsize
                + gt2.size * gt2.dtype.itemsize)
    partials = pl.pallas_call(
        kernel,
        out_shape=jax.ShapeDtypeStruct((num_blocks, 8, _LANES), jnp.float32),
        grid=(num_blocks,),
        in_specs=[
            pl.BlockSpec((block_rows, _LANES), lambda i: (i, 0)),
            pl.BlockSpec((block_rows, _LANES), lambda i: (i, 0)),
        ],
        out_specs=pl.BlockSpec((1, 8, _LANES), lambda i: (i, 0, 0)),
        compiler_params=pltpu.CompilerParams(
            dimension_semantics=("parallel",)),
        cost_estimate=pl.CostEstimate(
            flops=10 * n_elems,
            transcendentals=2 * n_elems,
            bytes_accessed=bytes_in + num_blocks * 8 * _LANES * 4,
        ),
    )(pred2, gt2)

    # Every lane of a partial tile holds that block's masked sum; apply the
    # single negate and the 1/B here instead of per element.
    return -jnp.sum(partials[:, 0, 0]) / jnp.float32(b)


if __name__ == "__main__":
    key = jax.random.PRNGKey(0)
    k1, k2, k3, k4, k5, k6, k7, k8 = jax.random.split(key, 8)

    # 1) Module-sized case (B=8): takes the small-B fused-XLA fast path.
    B = 8
    pred_cls = jax.nn.sigmoid(jax.random.normal(k1, (B,), dtype=jnp.float32))
    gt_cls = jax.random.bernoulli(k2, p=0.5, shape=(B,)).astype(jnp.float32)
    pred_bbox = jax.random.normal(k3, (B, 4), dtype=jnp.float32)
    gt_bbox = jax.random.normal(k4, (B, 4), dtype=jnp.float32)
    loss = jax.block_until_ready(
        condition_loss(pred_cls, gt_cls, pred_bbox, gt_bbox))
    ref = _loss_jax(pred_cls, gt_cls, B)
    assert jnp.allclose(loss, ref, atol=1e-4, rtol=1e-4), (loss, ref)

    # 2) Pallas path, B % 128 == 0 (free reshape, no pad), 2 "parallel" blocks.
    B2 = 2048
    pred2 = jax.nn.sigmoid(jax.random.normal(k5, (B2,), dtype=jnp.float32))
    gt2 = jax.random.bernoulli(k6, p=0.5, shape=(B2,)).astype(jnp.float32)
    loss2 = jax.block_until_ready(
        condition_loss(pred2, gt2, small_b_threshold=0))
    ref2 = _loss_jax(pred2, gt2, B2)
    assert jnp.allclose(loss2, ref2, atol=1e-4, rtol=1e-4), (loss2, ref2)

    # 3) Pallas path, ragged B (lane pad < 1 row + partial edge block with the
    #    in-kernel global-row mask), still 2 blocks.
    B3 = 1088
    pred3 = jax.nn.sigmoid(jax.random.normal(k7, (B3,), dtype=jnp.float32))
    gt3 = jax.random.bernoulli(k8, p=0.5, shape=(B3,)).astype(jnp.float32)
    loss3 = jax.block_until_ready(
        condition_loss(pred3, gt3, small_b_threshold=0))
    ref3 = _loss_jax(pred3, gt3, B3)
    assert jnp.allclose(loss3, ref3, atol=1e-4, rtol=1e-4), (loss3, ref3)

    # 4) Pallas path with bf16 predictions (native-width HBM move, 16-row
    #    sublane rounding, f32 math inside the kernel).
    pred4 = pred2.astype(jnp.bfloat16)
    loss4 = jax.block_until_ready(
        condition_loss(pred4, gt2, small_b_threshold=0))
    ref4 = _loss_jax(pred4, gt2, B2)
    assert jnp.allclose(loss4, ref4, atol=1e-4, rtol=1e-4), (loss4, ref4)

    print("KERNEL_OK")
</pallas_src>

<mosaic_0001>
module attributes {stable_mosaic.version = 11 : i64} {
  func.func @kernel(%arg0: i32, %arg1: memref<8x128xf32, #tpu.memory_space<vmem>>, %arg2: memref<8x128xf32, #tpu.memory_space<vmem>>, %arg3: memref<1x8x128xf32, #tpu.memory_space<vmem>>) attributes {dimension_semantics = [#tpu.dimension_semantics<parallel>], iteration_bounds = array<i64: 2>, scalar_prefetch = 0 : i64, scratch_operands = 0 : i64, tpu.core_type = #tpu.core_type<tc>, window_params = [{transform_indices = @transform_0, window_bounds = array<i64: 8, 128>}, {transform_indices = @transform_1, window_bounds = array<i64: 8, 128>}, {transform_indices = @transform_2, window_bounds = array<i64: 1, 8, 128>}]} {
    %c0 = arith.constant 0 : index
    %c0_0 = arith.constant 0 : index
    %0 = vector.load %arg1[%c0, %c0_0] : memref<8x128xf32, #tpu.memory_space<vmem>>, vector<8x128xf32>
    %c0_1 = arith.constant 0 : index
    %c0_2 = arith.constant 0 : index
    %1 = vector.load %arg2[%c0_1, %c0_2] : memref<8x128xf32, #tpu.memory_space<vmem>>, vector<8x128xf32>
    %2 = math.log %0 : vector<8x128xf32>
    %cst = arith.constant -1.000000e+02 : f32
    %3 = vector.broadcast %cst : f32 to vector<8x128xf32>
    %4 = arith.maximumf %2, %3 : vector<8x128xf32>
    %cst_3 = arith.constant 1.000000e+00 : f32
    %5 = vector.broadcast %cst_3 : f32 to vector<8x128xf32>
    %6 = arith.subf %5, %0 : vector<8x128xf32>
    %7 = math.log %6 : vector<8x128xf32>
    %cst_4 = arith.constant -1.000000e+02 : f32
    %8 = vector.broadcast %cst_4 : f32 to vector<8x128xf32>
    %9 = arith.maximumf %7, %8 : vector<8x128xf32>
    %10 = arith.subf %4, %9 : vector<8x128xf32>
    %11 = arith.mulf %1, %10 : vector<8x128xf32>
    %12 = arith.addf %9, %11 : vector<8x128xf32>
    %cst_5 = arith.constant 0.000000e+00 : f32
    %13 = vector.broadcast %cst_5 : f32 to vector<8x128xf32>
    %14 = arith.cmpf olt, %1, %13 : vector<8x128xf32>
    %15 = math.ceil %1 : vector<8x128xf32>
    %16 = math.floor %1 : vector<8x128xf32>
    %17 = arith.select %14, %15, %16 : vector<8x128xi1>, vector<8x128xf32>
    %cst_6 = arith.constant 1.000000e+00 : f32
    %18 = vector.broadcast %cst_6 : f32 to vector<8x128xf32>
    %19 = arith.cmpf oeq, %17, %18 : vector<8x128xf32>
    %cst_7 = arith.constant 0.000000e+00 : f32
    %20 = vector.broadcast %cst_7 : f32 to vector<8x128xf32>
    %21 = arith.cmpf oeq, %17, %20 : vector<8x128xf32>
    %22 = arith.ori %19, %21 : vector<8x128xi1>
    %cst_8 = arith.constant 0.000000e+00 : f32
    %23 = vector.broadcast %cst_8 : f32 to vector<8x128xf32>
    %24 = arith.select %22, %12, %23 : vector<8x128xi1>, vector<8x128xf32>
    %25 = vector.shape_cast %24 : vector<8x128xf32> to vector<1x8x128xf32>
    %cst_9 = arith.constant dense<0.000000e+00> : vector<1xf32>
    %26 = vector.multi_reduction <add>, %25, %cst_9 [1, 2] : vector<1x8x128xf32> to vector<1xf32>
    %27 = vector.shape_cast %26 : vector<1xf32> to vector<1x1x1xf32>
    %28 = vector.extract %27[0, 0, 0] : f32 from vector<1x1x1xf32>
    %29 = vector.broadcast %28 : f32 to vector<1x8x128xf32>
    %c0_10 = arith.constant 0 : index
    %c0_11 = arith.constant 0 : index
    %c0_12 = arith.constant 0 : index
    %30 = vector.load %arg3[%c0_10, %c0_11, %c0_12] : memref<1x8x128xf32, #tpu.memory_space<vmem>>, vector<1x8x128xf32>
    tpu.vector_store %arg3[%c0_10, %c0_11, %c0_12], %29 {strides = array<i32>} : memref<1x8x128xf32, #tpu.memory_space<vmem>>, vector<1x8x128xf32>,
    return
  }
  func.func @transform_0(%arg0: i32) -> (i32, i32) {
    %c0_i32 = arith.constant 0 : i32
    %c0_i32_0 = arith.constant 0 : i32
    return %arg0, %c0_i32 : i32, i32
  }
  func.func @transform_1(%arg0: i32) -> (i32, i32) {
    %c0_i32 = arith.constant 0 : i32
    %c0_i32_0 = arith.constant 0 : i32
    return %arg0, %c0_i32 : i32, i32
  }
  func.func @transform_2(%arg0: i32) -> (i32, i32, i32) {
    %c0_i32 = arith.constant 0 : i32
    %c0_i32_0 = arith.constant 0 : i32
    %c0_i32_1 = arith.constant 0 : i32
    return %arg0, %c0_i32, %c0_i32_0 : i32, i32, i32
  }
}

</mosaic_0001>

<llo_original>
// kernel: tpu_custom_call.1
$region0: #{tpu_custom_call.1}
  #allocation0 [shape = 'u32[]', space=smem, size = 0x4, offset = 0x4, fixed_abs, tag = 'smem constant byte address 0x4 - core index']
  #allocation1 [shape = 'u32[72,128]{1,0:T(1,128)}', space=vmem, size = 0x9000, scoped, tag = 'internal scratch']
  %s0 = inlined_call_operand.hbm [shape: f32[16,128], index: 0, kind: input, shape index: {}]
  %s1 = inlined_call_operand.hbm [shape: f32[16,128], index: 1, kind: input, shape index: {}]
  %s2 = inlined_call_operand.hbm [shape: f32[2,8,128], index: 2, kind: output, shape index: {}]
  %s3 = sld [smem:[#allocation0]]
  $region49: #{tpu_custom_call.1} parent=0
    _
  %s5 = ssub.s32 1, %s3
  %s6 = scalar_select 0, %s5, %s3
  $region1: #{tpu_custom_call.1} parent=0
    #allocation2 [shape = 'u8[8192]{0}', space=vmem, size = 0x2000, scoped, tag = 'input window, operand 0']
    #allocation3 [shape = 's32[2]{0}', space=sflag, size = 0x8, scoped, tag = 'scoped memory for tpu_custom_call.1']
    #allocation4 [shape = 's32[2]{0}', space=sflag, size = 0x8, scoped, tag = 'scoped memory for tpu_custom_call.1']
    #allocation5 [shape = 'u8[8192]{0}', space=vmem, size = 0x2000, scoped, tag = 'input window, operand 1']
    #allocation6 [shape = 's32[2]{0}', space=sflag, size = 0x8, scoped, tag = 'scoped memory for tpu_custom_call.1']
    #allocation7 [shape = 'u8[8192]{0}', space=vmem, size = 0x2000, scoped, tag = 'output window, operand 0']
    %7 = vsyncpa [#allocation3], 0
    %s8 = scalar_lea.sflag [#allocation3], 1
    %9 = vsyncpa %s8, 0
    %10 = vsyncpa [#allocation6], 0
    %s11 = scalar_lea.sflag [#allocation6], 1
    %12 = vsyncpa %s11, 0
    %13 = vsyncpa [#allocation4], 0
    %s14 = scalar_lea.sflag [#allocation4], 1
    %15 = vsyncpa %s14, 0
    loop: start=0, step=1, limit=4
    $region2: #{tpu_custom_call.1} parent=1 // loop_pre_header
      _
    $region3: #{tpu_custom_call.1} parent=1 // loop_header
      %s17 = sphi 0, %s21
      %p18 = scmp.ge.s32.totalorder %s17, 4
      %s27 = sphi 0, %s29
      %s30 = sphi 0, %s27
      %s31 = sphi 0, %s30
      %s47 = sphi 0, %s31
      %s53 = sphi 0, %s55
      %s56 = sphi 0, %s53
      %s57 = sphi 0, %s56
      %s73 = sphi 0, %s57
      %s79 = sphi 0, %s81
      %s82 = sphi 0, %s79
      %s83 = sphi 0, %s82
      %s99 = sphi 0, %s83
    $region4: #{tpu_custom_call.1} parent=1 // loop_header_branch
      %20 = sbr.rel (%p18) target = $region8
    $region5: #{tpu_custom_call.1} parent=1 // loop_body
      %s22 = ssub.s32 %s17, 1
      %s23 = ssub.s32 %s17, 2
      %s24 = sadd.s32 %s17, 1
      %s25 = ssub.s32 %s17, %s24
      %p26 = scmp.eq.s32.totalorder %s25, 0
      %s28 = sadd.s32 %s27, 1
      %s29 = scalar_select %p26, %s27, %s28
      %p32 = pneg %p26
      %p33 = scmp.eq.s32.totalorder %s17, 1
      %p34 = por %p32, %p33
      %p35 = scmp.ne.s32.totalorder %s27, %s30
      %p36 = scmp.eq.s32.totalorder %s17, 0
      %p37 = por %p35, %p36
      %p38 = scmp.ne.s32.totalorder %s27, %s30
      %p39 = scmp.eq.s32.totalorder %s22, 1
      %p40 = por %p38, %p39
      %p41 = scmp.ne.s32.totalorder %s30, %s31
      %p42 = scmp.eq.s32.totalorder %s22, 0
      %p43 = por %p41, %p42
      %p44 = scmp.ne.s32.totalorder %s30, %s31
      %p45 = scmp.eq.s32.totalorder %s23, 1
      %p46 = por %p44, %p45
      %p48 = scmp.ne.s32.totalorder %s31, %s47
      %p49 = scmp.eq.s32.totalorder %s23, 0
      %p50 = por %p48, %p49
      %s51 = ssub.s32 %s17, %s24
      %p52 = scmp.eq.s32.totalorder %s51, 0
      %s54 = sadd.s32 %s53, 1
      %s55 = scalar_select %p52, %s53, %s54
      %p58 = pneg %p52
      %p59 = scmp.eq.s32.totalorder %s17, 1
      %p60 = por %p58, %p59
      %p61 = scmp.ne.s32.totalorder %s53, %s56
      %p62 = scmp.eq.s32.totalorder %s17, 0
      %p63 = por %p61, %p62
      %p64 = scmp.ne.s32.totalorder %s53, %s56
      %p65 = scmp.eq.s32.totalorder %s22, 1
      %p66 = por %p64, %p65
      %p67 = scmp.ne.s32.totalorder %s56, %s57
      %p68 = scmp.eq.s32.totalorder %s22, 0
      %p69 = por %p67, %p68
      %p70 = scmp.ne.s32.totalorder %s56, %s57
      %p71 = scmp.eq.s32.totalorder %s23, 1
      %p72 = por %p70, %p71
      %p74 = scmp.ne.s32.totalorder %s57, %s73
      %p75 = scmp.eq.s32.totalorder %s23, 0
      %p76 = por %p74, %p75
      %s77 = ssub.s32 %s17, %s24
      %p78 = scmp.eq.s32.totalorder %s77, 0
      %s80 = sadd.s32 %s79, 1
      %s81 = scalar_select %p78, %s79, %s80
      %p84 = pneg %p78
      %p85 = scmp.eq.s32.totalorder %s17, 1
      %p86 = por %p84, %p85
      %p87 = scmp.ne.s32.totalorder %s79, %s82
      %p88 = scmp.eq.s32.totalorder %s17, 0
      %p89 = por %p87, %p88
      %p90 = scmp.ne.s32.totalorder %s79, %s82
      %p91 = scmp.eq.s32.totalorder %s22, 1
      %p92 = por %p90, %p91
      %p93 = scmp.ne.s32.totalorder %s82, %s83
      %p94 = scmp.eq.s32.totalorder %s22, 0
      %p95 = por %p93, %p94
      %p96 = scmp.ne.s32.totalorder %s82, %s83
      %p97 = scmp.eq.s32.totalorder %s23, 1
      %p98 = por %p96, %p97
      %p100 = scmp.ne.s32.totalorder %s83, %s99
      %p101 = scmp.eq.s32.totalorder %s23, 0
      %p102 = por %p100, %p101
      %p103 = scmp.le.s32.totalorder 1, %s17
      %p104 = scmp.lt.s32.totalorder %s17, 3
      %p105 = pnand %p103, %p104
      %p106 = pneg %p105
      // Predicated region
      $region9: #{tpu_custom_call.1} parent=5 // pred_check
        _
      $region10: #{tpu_custom_call.1} parent=5 // pred_check_branch
        %108 = sbr.rel (%p105) target = $region12
      $region11: #{tpu_custom_call.1} parent=5 // pred_region
        %s109 = ssub.s32 %s17, 1
      $region12: #{tpu_custom_call.1} parent=5 // pred_fallthru
        _
      %p110 = scmp.lt.s32.totalorder %s17, 2
      // Predicated region
      $region13: #{tpu_custom_call.1} parent=5 // pred_check
        %p111 = pneg %p110
      $region14: #{tpu_custom_call.1} parent=5 // pred_check_branch
        %113 = sbr.rel (%p111) target = $region16
      $region15: #{tpu_custom_call.1} parent=5 // pred_region
        // Predicated region
        $region17: #{tpu_custom_call.1} parent=15 // pred_check
          %p114 = pneg %p37
        $region18: #{tpu_custom_call.1} parent=15 // pred_check_branch
          %116 = sbr.rel (%p114) target = $region20
        $region19: #{tpu_custom_call.1} parent=15 // pred_region
          %s117 = sand.u32 %s27, 1
          %s118 = scalar_lea.sflag [#allocation3], %s117
          %s119 = sand.u32 %s27, 1
          %s120 = smul.addr %s119, 8
          %s121 = scalar_lea.vmem [#allocation2], %s120
          %123 = vsyncadd %s118, 0
          %s124 = smul.addr %s17, 8
          %s125 = scalar_lea.hbm %s0, %s124
          %s127 = sshll.u32 %s125, 4
          %s128 = int_to_ptr.hbm [resolvable:$true] %s127
          %s129 = sshll.u32 %s121, 4
          %s130 = int_to_ptr.vmem [resolvable:$true] %s129
          %132 = dma.hbm_to_vmem [thread:$0]  %s128, 128, %s130, %s118
        $region20: #{tpu_custom_call.1} parent=15 // pred_fallthru
          _
        // Predicated region
        $region21: #{tpu_custom_call.1} parent=15 // pred_check
          %p133 = pneg %p63
        $region22: #{tpu_custom_call.1} parent=15 // pred_check_branch
          %135 = sbr.rel (%p133) target = $region24
        $region23: #{tpu_custom_call.1} parent=15 // pred_region
          %s136 = sand.u32 %s53, 1
          %s137 = scalar_lea.sflag [#allocation6], %s136
          %s138 = sand.u32 %s53, 1
          %s139 = smul.addr %s138, 8
          %s140 = scalar_lea.vmem [#allocation5], %s139
          %142 = vsyncadd %s137, 0
          %s143 = smul.addr %s17, 8
          %s144 = scalar_lea.hbm %s1, %s143
          %s146 = sshll.u32 %s144, 4
          %s147 = int_to_ptr.hbm [resolvable:$true] %s146
          %s148 = sshll.u32 %s140, 4
          %s149 = int_to_ptr.vmem [resolvable:$true] %s148
          %151 = dma.hbm_to_vmem [thread:$0]  %s147, 128, %s149, %s137
        $region24: #{tpu_custom_call.1} parent=15 // pred_fallthru
          _
      $region16: #{tpu_custom_call.1} parent=5 // pred_fallthru
        _
      %p152 = scmp.le.s32.totalorder 1, %s17
      %p153 = scmp.lt.s32.totalorder %s17, 3
      %p154 = pnand %p152, %p153
      %p155 = pneg %p154
      // Predicated region
      $region25: #{tpu_custom_call.1} parent=5 // pred_check
        _
      $region26: #{tpu_custom_call.1} parent=5 // pred_check_branch
        %157 = sbr.rel (%p154) target = $region28
      $region27: #{tpu_custom_call.1} parent=5 // pred_region
        %s158 = ssub.s32 %s17, 1
        %s159 = sand.u32 %s30, 1
        %s160 = scalar_lea.sflag [#allocation3], %s159
        %s161 = sand.u32 %s30, 1
        %s162 = smul.addr %s161, 8
        %s163 = scalar_lea.vmem [#allocation2], %s162
        // Predicated region
        $region29: #{tpu_custom_call.1} parent=27 // pred_check
          %p164 = pneg %p43
        $region30: #{tpu_custom_call.1} parent=27 // pred_check_branch
          %166 = sbr.rel (%p164) target = $region32
        $region31: #{tpu_custom_call.1} parent=27 // pred_region
          %168 = dma.done %s160, 128
        $region32: #{tpu_custom_call.1} parent=27 // pred_fallthru
          _
        %s169 = sand.u32 %s56, 1
        %s170 = scalar_lea.sflag [#allocation6], %s169
        %s171 = sand.u32 %s56, 1
        %s172 = smul.addr %s171, 8
        %s173 = scalar_lea.vmem [#allocation5], %s172
        // Predicated region
        $region33: #{tpu_custom_call.1} parent=27 // pred_check
          %p174 = pneg %p69
        $region34: #{tpu_custom_call.1} parent=27 // pred_check_branch
          %176 = sbr.rel (%p174) target = $region36
        $region35: #{tpu_custom_call.1} parent=27 // pred_region
          %178 = dma.done %s170, 128
        $region36: #{tpu_custom_call.1} parent=27 // pred_fallthru
          _
        %s179 = sand.u32 %s30, 1
        %s180 = scalar_lea.sflag [#allocation3], %s179
        %s181 = sand.u32 %s30, 1
        %s182 = smul.addr %s181, 8
        %s183 = scalar_lea.vmem [#allocation2], %s182
        %p184 = pneg %p43
        %p185 = pneg %p40
        %s186 = sand.u32 %s56, 1
        %s187 = scalar_lea.sflag [#allocation6], %s186
        %s188 = sand.u32 %s56, 1
        %s189 = smul.addr %s188, 8
        %s190 = scalar_lea.vmem [#allocation5], %s189
        %p191 = pneg %p69
        %p192 = pneg %p66
        %p193 = pneg %p95
        %p194 = pneg %p92
        %s195 = sand.u32 %s82, 1
        %s196 = scalar_lea.sflag [#allocation4], %s195
        %s197 = sand.u32 %s82, 1
        %s198 = smul.addr %s197, 8
        %s199 = scalar_lea.vmem [#allocation7], %s198
        %v200 = vld [vmem:[%s163] sm:$0xff]
        %v201 = vld [vmem:[%s173] sm:$0xff]
        %v202 = vlog2.pop %v200
        %v203 = vmul.f32 %v202, 0.6931472
        %v204 = vmax.f32 %v203, -100.0
        %v205 = vsub.f32 1.0, %v200
        %v206 = vlog2.pop %v205
        %v207 = vmul.f32 %v206, 0.6931472
        %v208 = vmax.f32 %v207, -100.0
        %v209 = vsub.f32 %v204, %v208
        %v210 = vmul.f32 %v201, %v209
        %v211 = vadd.f32 %v208, %v210
        %vm212 = vcmp.lt.f32.partialorder %v201, 0.0
        %v213 = vceil.f32 %v201
        %v214 = vfloor.f32 %v201
        %v215 = vsel %vm212, %v213, %v214
        %vm216 = vcmp.eq.f32.partialorder %v215, 1.0
        %vm217 = vcmp.eq.f32.partialorder %v215, 0.0
        %vm218 = vmor %vm216, %vm217
        %v219 = vsel %vm218, %v211, 0.0
        %220 = vadd.xlane.f32.xlu0 %v219
        %v221 = vpop.xlane.xlu0 %220
        %v222 = vrot.slane %v221, 4
        %v223 = vadd.f32 %v221, %v222
        %v224 = vrot.slane %v223, 2
        %v225 = vadd.f32 %v223, %v224
        %v226 = vrot.slane %v225, 1
        %v227 = vadd.f32 %v225, %v226
        %s228 = vtos %v227
        %v229 = vstv %s228
        %230 = vst [vmem:[%s199] sm:$0xff] %v229
        %s231 = sand.u32 %s82, 1
        %s232 = scalar_lea.sflag [#allocation4], %s231
        %s233 = sand.u32 %s82, 1
        %s234 = smul.addr %s233, 8
        %s235 = scalar_lea.vmem [#allocation7], %s234
        // Predicated region
        $region37: #{tpu_custom_call.1} parent=27 // pred_check
          %p236 = pneg %p92
        $region38: #{tpu_custom_call.1} parent=27 // pred_check_branch
          %238 = sbr.rel (%p236) target = $region40
        $region39: #{tpu_custom_call.1} parent=27 // pred_region
          %240 = vsyncadd %s232, 0
          %s241 = smul.addr %s22, 8
          %s242 = scalar_lea.hbm %s2, %s241
          %s244 = sshll.u32 %s235, 4
          %s245 = int_to_ptr.vmem [resolvable:$true] %s244
          %s246 = sshll.u32 %s242, 4
          %s247 = int_to_ptr.hbm [resolvable:$true] %s246
          %249 = dma.vmem_to_hbm [thread:$0]  %s245, 128, %s247, %s232
        $region40: #{tpu_custom_call.1} parent=27 // pred_fallthru
          _
      $region28: #{tpu_custom_call.1} parent=5 // pred_fallthru
        _
      %p250 = scmp.le.s32.totalorder 2, %s17
      // Predicated region
      $region41: #{tpu_custom_call.1} parent=5 // pred_check
        %p251 = pneg %p250
      $region42: #{tpu_custom_call.1} parent=5 // pred_check_branch
        %253 = sbr.rel (%p251) target = $region44
      $region43: #{tpu_custom_call.1} parent=5 // pred_region
        %s254 = ssub.s32 %s17, 2
        // Predicated region
        $region45: #{tpu_custom_call.1} parent=43 // pred_check
          %p255 = pneg %p98
        $region46: #{tpu_custom_call.1} parent=43 // pred_check_branch
          %257 = sbr.rel (%p255) target = $region48
        $region47: #{tpu_custom_call.1} parent=43 // pred_region
          %s258 = sand.u32 %s83, 1
          %s259 = scalar_lea.sflag [#allocation4], %s258
          %s260 = sand.u32 %s83, 1
          %s261 = smul.addr %s260, 8
          %s262 = scalar_lea.vmem [#allocation7], %s261
          %264 = dma.done %s259, 128
        $region48: #{tpu_custom_call.1} parent=43 // pred_fallthru
          _
      $region44: #{tpu_custom_call.1} parent=5 // pred_fallthru
        _
    $region6: #{tpu_custom_call.1} parent=1 // loop_footer
      %s21 = sadd.s32 1, %s17
    $region7: #{tpu_custom_call.1} parent=1 // loop_footer_branch
      %16 = sbr.rel target = $region3
    $region8: #{tpu_custom_call.1} parent=1 // loop_exit
      _
    %265 = vsyncpa [#allocation3], 1
    %s266 = scalar_lea.sflag [#allocation3], 1
    %267 = vsyncpa %s266, 1
    %268 = vsyncpa [#allocation6], 1
    %s269 = scalar_lea.sflag [#allocation6], 1
    %270 = vsyncpa %s269, 1
    %271 = vsyncpa [#allocation4], 1
    %s272 = scalar_lea.sflag [#allocation4], 1
    %273 = vsyncpa %s272, 1

</llo_original>
